<compile_context>
chip_gen: v7x
topology: tpu7x:2x2x1
jax: 0.10.0
libtpu: 0.0.40
codegen_flags: <defaults>
</compile_context>

<pallas_src>
import functools

import jax
import jax.numpy as jnp
from jax.experimental import pallas as pl
from jax.experimental.pallas import tpu as pltpu


def _cdiv(a: int, b: int) -> int:
    return -(-a // b)


def _round_up(x: int, m: int) -> int:
    return ((x + m - 1) // m) * m


def _balanced_tile(dim: int, max_tile: int, align: int) -> int:
    """Tile size <= max_tile that minimizes padding/masking waste.

    If the whole dimension fits in one tile, use the exact dimension: a block
    dim equal to the full array dim is always legal on TPU, so no padding or
    alignment is needed at all.  Otherwise pick the smallest aligned tile that
    still covers the dimension in cdiv(dim, max_tile) blocks.
    """
    if dim <= max_tile:
        return dim
    num_blocks = _cdiv(dim, max_tile)
    return _round_up(_cdiv(dim, num_blocks), align)


# ---------------------------------------------------------------------------
# Kernel: (i, j, k) grid, k is the reduction axis (last).  The output
# BlockSpec is independent of k, so the f32 output tile stays resident in
# VMEM across the whole K loop and we accumulate directly into it.
# ---------------------------------------------------------------------------
def _matmul_kernel(a_ref, b_ref, o_ref):
    @pl.when(pl.program_id(2) == 0)
    def _():
        o_ref[...] = jnp.zeros_like(o_ref)

    o_ref[...] += jnp.dot(
        a_ref[...], b_ref[...], preferred_element_type=jnp.float32
    )


# Tile caps: 1024-wide output tiles halve A/B re-streaming vs 512; with f32
# blocks that is ~24 MiB double-buffered -> fits comfortably under the 48 MiB
# scoped-VMEM limit below on v5e/v6e (128 MiB physical) and v7x (64 MiB).
_TM_MAX = 1024
_TN_MAX = 1024
_TK_MAX = 1024
_VMEM_LIMIT_BYTES = 48 * 1024 * 1024


@functools.partial(jax.jit, static_argnames=("tm_max", "tn_max", "tk_max"))
def matmul_pallas(a: jax.Array, b: jax.Array, *,
                  tm_max: int = _TM_MAX,
                  tn_max: int = _TN_MAX,
                  tk_max: int = _TK_MAX) -> jax.Array:
    """C = A @ B via a tiled Pallas TPU matmul (f32 accumulation)."""
    M, K = a.shape
    K2, N = b.shape
    assert K == K2, "inner dimensions must match"

    # Always accumulate / emit in f32 (matches the f32 CUDA reference).
    out_dtype = jnp.promote_types(jnp.promote_types(a.dtype, b.dtype),
                                  jnp.float32)

    # Balanced tiles: minimal padding waste, MXU/layout aligned.
    tm = _balanced_tile(M, tm_max, 8)     # sublane-aligned (or == M)
    tn = _balanced_tile(N, tn_max, 128)   # lane-aligned     (or == N)
    tk = _balanced_tile(K, tk_max, 128)   # lane-aligned     (or == K)

    # Pad only K.  M / N edge blocks are handled by Pallas masking: clipped
    # writes mean garbage in out-of-range rows/cols never reaches HBM, and it
    # never contributes to valid output elements.  Garbage along K *would*
    # corrupt valid outputs, so zero-pad K to a multiple of tk when needed.
    Kp = _round_up(K, tk)
    if Kp != K:
        a = jnp.pad(a, ((0, 0), (0, Kp - K)))
        b = jnp.pad(b, ((0, Kp - K), (0, 0)))

    grid = (_cdiv(M, tm), _cdiv(N, tn), Kp // tk)

    return pl.pallas_call(
        _matmul_kernel,
        out_shape=jax.ShapeDtypeStruct((M, N), out_dtype),
        grid_spec=pltpu.PrefetchScalarGridSpec(
            num_scalar_prefetch=0,
            grid=grid,
            in_specs=[
                pl.BlockSpec((tm, tk), lambda i, j, k: (i, k)),
                pl.BlockSpec((tk, tn), lambda i, j, k: (k, j)),
            ],
            out_specs=pl.BlockSpec((tm, tn), lambda i, j, k: (i, j)),
        ),
        compiler_params=pltpu.CompilerParams(
            dimension_semantics=("parallel", "parallel", "arbitrary"),
            vmem_limit_bytes=_VMEM_LIMIT_BYTES,
        ),
        cost_estimate=pl.CostEstimate(
            flops=2 * M * N * K,
            transcendentals=0,
            bytes_accessed=(M * K + K * N + M * N)
            * jnp.dtype(out_dtype).itemsize,
        ),
    )(a, b)


if __name__ == "__main__":
    key = jax.random.PRNGKey(0)
    k1, k2, k3, k4 = jax.random.split(key, 4)

    # --- small shapes matching the module forward (plain 2-D matmul) -------
    M, K, N = 64, 96, 80
    A = jax.random.normal(k1, (M, K), dtype=jnp.float32)
    B = jax.random.normal(k2, (K, N), dtype=jnp.float32)
    C = jax.block_until_ready(matmul_pallas(A, B))
    C_ref = jnp.dot(A, B, precision=jax.lax.Precision.HIGHEST)
    assert C.shape == (M, N) and C.dtype == jnp.float32
    assert jnp.allclose(C, C_ref, atol=1e-3, rtol=1e-3), float(
        jnp.max(jnp.abs(C - C_ref))
    )

    # --- stress the tiled machinery: non-multiple shapes, K padding, -------
    # --- masked M/N edge blocks (small tile caps force a real 3-D grid) ----
    M2, K2_, N2 = 300, 260, 200
    A2 = jax.random.normal(k3, (M2, K2_), dtype=jnp.float32)
    B2 = jax.random.normal(k4, (K2_, N2), dtype=jnp.float32)
    C2 = jax.block_until_ready(
        matmul_pallas(A2, B2, tm_max=128, tn_max=128, tk_max=128)
    )
    C2_ref = jnp.dot(A2, B2, precision=jax.lax.Precision.HIGHEST)
    assert C2.shape == (M2, N2)
    assert jnp.allclose(C2, C2_ref, atol=1e-3, rtol=1e-3), float(
        jnp.max(jnp.abs(C2 - C2_ref))
    )

    print("KERNEL_OK")
</pallas_src>

<mosaic_0001>
module attributes {stable_mosaic.version = 11 : i64} {
  func.func @_matmul_kernel(%arg0: i32, %arg1: i32, %arg2: i32, %arg3: memref<64x96xf32, #tpu.memory_space<vmem>>, %arg4: memref<96x80xf32, #tpu.memory_space<vmem>>, %arg5: memref<64x80xf32, #tpu.memory_space<vmem>>) attributes {dimension_semantics = [#tpu.dimension_semantics<parallel>, #tpu.dimension_semantics<parallel>, #tpu.dimension_semantics<arbitrary>], iteration_bounds = array<i64: 1, 1, 1>, scalar_prefetch = 0 : i64, scratch_operands = 0 : i64, tpu.core_type = #tpu.core_type<tc>, window_params = [{transform_indices = @transform_0, window_bounds = array<i64: 64, 96>}, {transform_indices = @transform_1, window_bounds = array<i64: 96, 80>}, {transform_indices = @transform_2, window_bounds = array<i64: 64, 80>}]} {
    %c0_i32 = arith.constant 0 : i32
    %0 = arith.cmpi eq, %arg2, %c0_i32 : i32
    %1 = arith.extui %0 : i1 to i32
    %c0_i32_0 = arith.constant 0 : i32
    %2 = arith.cmpi ne, %1, %c0_i32_0 : i32
    scf.if %2 {
      %cst_8 = arith.constant 0.000000e+00 : f32
      %9 = vector.broadcast %cst_8 : f32 to vector<64x80xf32>
      %c0_9 = arith.constant 0 : index
      %c0_10 = arith.constant 0 : index
      %10 = vector.load %arg5[%c0_9, %c0_10] : memref<64x80xf32, #tpu.memory_space<vmem>>, vector<64x80xf32>
      tpu.vector_store %arg5[%c0_9, %c0_10], %9 {strides = array<i32>} : memref<64x80xf32, #tpu.memory_space<vmem>>, vector<64x80xf32>,
    } else {
    }
    %c0 = arith.constant 0 : index
    %c0_1 = arith.constant 0 : index
    %3 = vector.load %arg5[%c0, %c0_1] : memref<64x80xf32, #tpu.memory_space<vmem>>, vector<64x80xf32>
    %c0_2 = arith.constant 0 : index
    %c0_3 = arith.constant 0 : index
    %4 = vector.load %arg3[%c0_2, %c0_3] : memref<64x96xf32, #tpu.memory_space<vmem>>, vector<64x96xf32>
    %c0_4 = arith.constant 0 : index
    %c0_5 = arith.constant 0 : index
    %5 = vector.load %arg4[%c0_4, %c0_5] : memref<96x80xf32, #tpu.memory_space<vmem>>, vector<96x80xf32>
    %cst = arith.constant dense<0.000000e+00> : vector<64x80xf32>
    %6 = tpu.matmul %4, %5, %cst {dimension_numbers = #tpu.dot_dimension_numbers<[1], [0], [0], [1], [0, 0, 1, 1], [], []>} : vector<64x96xf32>, vector<96x80xf32>, vector<64x80xf32> -> vector<64x80xf32>
    %7 = arith.addf %3, %6 : vector<64x80xf32>
    %c0_6 = arith.constant 0 : index
    %c0_7 = arith.constant 0 : index
    %8 = vector.load %arg5[%c0_6, %c0_7] : memref<64x80xf32, #tpu.memory_space<vmem>>, vector<64x80xf32>
    tpu.vector_store %arg5[%c0_6, %c0_7], %7 {strides = array<i32>} : memref<64x80xf32, #tpu.memory_space<vmem>>, vector<64x80xf32>,
    return
  }
  func.func @transform_0(%arg0: i32, %arg1: i32, %arg2: i32) -> (i32, i32) {
    %c0_i32 = arith.constant 0 : i32
    return %arg0, %arg2 : i32, i32
  }
  func.func @transform_1(%arg0: i32, %arg1: i32, %arg2: i32) -> (i32, i32) {
    %c0_i32 = arith.constant 0 : i32
    return %arg2, %arg1 : i32, i32
  }
  func.func @transform_2(%arg0: i32, %arg1: i32, %arg2: i32) -> (i32, i32) {
    %c0_i32 = arith.constant 0 : i32
    return %arg0, %arg1 : i32, i32
  }
}

</mosaic_0001>

<llo_original>
// kernel: matmul_pallas.1
$region0: #{matmul_pallas.1}
  #allocation0 [shape = 'u32[]', space=smem, size = 0x4, offset = 0x4, fixed_abs, tag = 'smem constant byte address 0x4 - core index']
  #allocation1 [shape = 'u32[144,128]{1,0:T(1,128)}', space=vmem, size = 0x12000, scoped, tag = 'internal scratch']
  %s0 = inlined_call_operand.vmem [shape: f32[64,96], index: 0, kind: input, shape index: {}]
  %s1 = inlined_call_operand.vmem [shape: f32[96,80], index: 1, kind: input, shape index: {}]
  %s2 = inlined_call_operand.hbm [shape: f32[64,80], index: 2, kind: output, shape index: {}]
  %s3 = sld [smem:[#allocation0]]
  $region22: #{matmul_pallas.1} parent=0
    _
  %s5 = ssub.s32 1, %s3
  %s6 = scalar_select 0, %s5, %s3
  $region1: #{matmul_pallas.1} parent=0
    #allocation2 [shape = 'u8[32768]{0}', space=vmem, size = 0x8000, scoped, tag = 'output window, operand 0, single buffered']
    #allocation3 [shape = 's32[1]{0}', space=sflag, size = 0x4, scoped, tag = 'scoped memory for matmul_pallas.1']
    %7 = vsyncpa [#allocation3], 0
    // Predicated region
    $region2: #{matmul_pallas.1} parent=1 // pred_check
      _
    $region3: #{matmul_pallas.1} parent=1 // pred_check_branch
      %9 = sbr.rel (0) target = $region5
    $region4: #{matmul_pallas.1} parent=1 // pred_region
      _
    $region5: #{matmul_pallas.1} parent=1 // pred_fallthru
      _
    // Predicated region
    $region6: #{matmul_pallas.1} parent=1 // pred_check
      _
    $region7: #{matmul_pallas.1} parent=1 // pred_check_branch
      %11 = sbr.rel (0) target = $region9
    $region8: #{matmul_pallas.1} parent=1 // pred_region
      _
    $region9: #{matmul_pallas.1} parent=1 // pred_fallthru
      _
    %p12 = scmp.eq.s32.totalorder 0, 0
    // Predicated region
    $region10: #{matmul_pallas.1} parent=1 // pred_check
      %p13 = pneg %p12
    $region11: #{matmul_pallas.1} parent=1 // pred_check_branch
      %15 = sbr.rel (%p13) target = $region13
    $region12: #{matmul_pallas.1} parent=1 // pred_region
      %vm16 = vcmask 654336
      %17 = vst.msk [vmem:[#allocation2] sm:$0xff] %vm16, 0.0
      %18 = vst.msk [vmem:[#allocation2 + $0x8] sm:$0xff] %vm16, 0.0
      %19 = vst.msk [vmem:[#allocation2 + $0x10] sm:$0xff] %vm16, 0.0
      %20 = vst.msk [vmem:[#allocation2 + $0x18] sm:$0xff] %vm16, 0.0
      %21 = vst.msk [vmem:[#allocation2 + $0x20] sm:$0xff] %vm16, 0.0
      %22 = vst.msk [vmem:[#allocation2 + $0x28] sm:$0xff] %vm16, 0.0
      %23 = vst.msk [vmem:[#allocation2 + $0x30] sm:$0xff] %vm16, 0.0
      %24 = vst.msk [vmem:[#allocation2 + $0x38] sm:$0xff] %vm16, 0.0
    $region13: #{matmul_pallas.1} parent=1 // pred_fallthru
      _
    %v25 = vld [vmem:[#allocation2] sm:$0xff]
    %v26 = vld [vmem:[#allocation2 + $0x8] sm:$0xff]
    %v27 = vld [vmem:[#allocation2 + $0x10] sm:$0xff]
    %v28 = vld [vmem:[#allocation2 + $0x18] sm:$0xff]
    %v29 = vld [vmem:[#allocation2 + $0x20] sm:$0xff]
    %v30 = vld [vmem:[#allocation2 + $0x28] sm:$0xff]
    %v31 = vld [vmem:[#allocation2 + $0x30] sm:$0xff]
    %v32 = vld [vmem:[#allocation2 + $0x38] sm:$0xff]
    %v33 = vld [vmem:[%s0] sm:$0xff]
    %v34 = vld [vmem:[%s0 + $0x8] sm:$0xff]
    %v35 = vld [vmem:[%s0 + $0x10] sm:$0xff]
    %v36 = vld [vmem:[%s0 + $0x18] sm:$0xff]
    %v37 = vld [vmem:[%s0 + $0x20] sm:$0xff]
    %v38 = vld [vmem:[%s0 + $0x28] sm:$0xff]
    %v39 = vld [vmem:[%s0 + $0x30] sm:$0xff]
    %v40 = vld [vmem:[%s0 + $0x38] sm:$0xff]
    %v41 = vld [vmem:[%s1] sm:$0xff]
    %v42 = vld [vmem:[%s1 + $0x8] sm:$0xff]
    %v43 = vld [vmem:[%s1 + $0x10] sm:$0xff]
    %v44 = vld [vmem:[%s1 + $0x18] sm:$0xff]
    %v45 = vld [vmem:[%s1 + $0x20] sm:$0xff]
    %v46 = vld [vmem:[%s1 + $0x28] sm:$0xff]
    %v47 = vld [vmem:[%s1 + $0x30] sm:$0xff]
    %v48 = vld [vmem:[%s1 + $0x38] sm:$0xff]
    %v49 = vld [vmem:[%s1 + $0x40] sm:$0xff]
    %v50 = vld [vmem:[%s1 + $0x48] sm:$0xff]
    %v51 = vld [vmem:[%s1 + $0x50] sm:$0xff]
    %v52 = vld [vmem:[%s1 + $0x58] sm:$0xff]
    %vm53 = vcmask 785408
    %v55 = vsel %vm53, %v33, 0
    %v58 = vsel %vm53, %v34, 0
    %v61 = vsel %vm53, %v35, 0
    %v64 = vsel %vm53, %v36, 0
    %v67 = vsel %vm53, %v37, 0
    %v70 = vsel %vm53, %v38, 0
    %v73 = vsel %vm53, %v39, 0
    %v76 = vsel %vm53, %v40, 0
    %78 = vmatprep.subr.mxu0 0.0
    %79 = vmatpush1.msra.mxu0 %v41
    %80 = vmatprep.subr.mxu0 0.0
    %81 = vmatpush1.msra.mxu0 %v42
    %82 = vmatprep.subr.mxu0 0.0
    %83 = vmatpush1.msra.mxu0 %v43
    %84 = vmatprep.subr.mxu0 0.0
    %85 = vmatpush1.msra.mxu0 %v44
    %86 = vmatprep.subr.mxu0 0.0
    %87 = vmatpush1.msra.mxu0 %v45
    %88 = vmatprep.subr.mxu0 0.0
    %89 = vmatpush1.msra.mxu0 %v46
    %90 = vmatprep.subr.mxu0 0.0
    %91 = vmatpush1.msra.mxu0 %v47
    %92 = vmatprep.subr.mxu0 0.0
    %93 = vmatpush1.msra.mxu0 %v48
    %94 = vmatprep.subr.mxu0 0.0
    %95 = vmatpush1.msra.mxu0 %v49
    %96 = vmatprep.subr.mxu0 0.0
    %97 = vmatpush1.msra.mxu0 %v50
    %98 = vmatprep.subr.mxu0 0.0
    %99 = vmatpush1.msra.mxu0 %v51
    %100 = vmatprep.subr.mxu0 0.0
    %101 = vmatpush1.msra.mxu0 %v52
    %102 = vmatprep.subr.mxu0 0.0
    %103 = vmatpush1.msra.mxu0 0.0
    %104 = vmatprep.subr.mxu0 0.0
    %105 = vmatpush1.msra.mxu0 0.0
    %106 = vmatprep.subr.mxu0 0.0
    %107 = vmatpush1.msra.mxu0 0.0
    %108 = vmatprep.subr.mxu0 0.0
    %109 = vmatpush1.msra.mxu0 0.0
    %110 = vmatprep.subr.mxu0 0.0
    %111 = vmatpush1.msra.mxu0 0.0
    %112 = vmatprep.subr.mxu0 0.0
    %113 = vmatpush1.msra.mxu0 0.0
    %114 = vmatprep.subr.mxu0 0.0
    %115 = vmatpush1.msra.mxu0 0.0
    %116 = vmatprep.subr.mxu0 0.0
    %117 = vmatpush1.msra.mxu0 0.0
    %118 = vmatprep.subr.mxu0 0.0
    %119 = vmatpush1.msra.mxu0 0.0
    %120 = vmatprep.subr.mxu0 0.0
    %121 = vmatpush1.msra.mxu0 0.0
    %122 = vmatprep.subr.mxu0 0.0
    %123 = vmatpush1.msra.mxu0 0.0
    %124 = vmatprep.subr.mxu0 0.0
    %125 = vmatpush1.msra.mxu0 0.0
    %126 = vmatprep.subr.mxu0 0.0
    %127 = vmatpush1.msra.mxu0 0.0
    %128 = vmatprep.subr.mxu0 0.0
    %129 = vmatpush1.msra.mxu0 0.0
    %130 = vmatprep.subr.mxu0 0.0
    %131 = vmatpush1.msra.mxu0 0.0
    %132 = vmatprep.subr.mxu0 0.0
    %133 = vmatpush1.msra.mxu0 0.0
    %134 = vmatprep.subr.mxu0 0.0
    %135 = vmatpush1.msra.mxu0 0.0
    %136 = vmatprep.subr.mxu0 0.0
    %137 = vmatpush1.msra.mxu0 0.0
    %138 = vmatprep.subr.mxu0 0.0
    %139 = vmatpush1.msra.mxu0 0.0
    %140 = vmatprep.subr.mxu0 0.0
    %141 = vmatpush1.msra.mxu0 0.0
    %142 = vmatprep.mubr.f32.mxu0 0.0
    %143 = vmatmul.mubr.f32.gmra.mrb[0].mxu0 %v55
    %v144 = vpop.f32.mrb[0].mxu0
    %v145 = vadd.f32 0.0, %v144
    %v146 = vpop.f32.mrb[0].mxu0
    %147 = vmatprep.mubr.f32.mxu0 0.0
    %148 = vmatmul.mubr.f32.gmra.mrb[0].mxu0 %v58
    %v149 = vpop.f32.mrb[0].mxu0
    %v150 = vadd.f32 0.0, %v149
    %v151 = vpop.f32.mrb[0].mxu0
    %152 = vmatprep.mubr.f32.mxu0 0.0
    %153 = vmatmul.mubr.f32.gmra.mrb[0].mxu0 %v61
    %v154 = vpop.f32.mrb[0].mxu0
    %v155 = vadd.f32 0.0, %v154
    %v156 = vpop.f32.mrb[0].mxu0
    %157 = vmatprep.mubr.f32.mxu0 0.0
    %158 = vmatmul.mubr.f32.gmra.mrb[0].mxu0 %v64
    %v159 = vpop.f32.mrb[0].mxu0
    %v160 = vadd.f32 0.0, %v159
    %v161 = vpop.f32.mrb[0].mxu0
    %162 = vmatprep.mubr.f32.mxu0 0.0
    %163 = vmatmul.mubr.f32.gmra.mrb[0].mxu0 %v67
    %v164 = vpop.f32.mrb[0].mxu0
    %v165 = vadd.f32 0.0, %v164
    %v166 = vpop.f32.mrb[0].mxu0
    %167 = vmatprep.mubr.f32.mxu0 0.0
    %168 = vmatmul.mubr.f32.gmra.mrb[0].mxu0 %v70
    %v169 = vpop.f32.mrb[0].mxu0
    %v170 = vadd.f32 0.0, %v169
    %v171 = vpop.f32.mrb[0].mxu0
    %172 = vmatprep.mubr.f32.mxu0 0.0
    %173 = vmatmul.mubr.f32.gmra.mrb[0].mxu0 %v73
    %v174 = vpop.f32.mrb[0].mxu0
    %v175 = vadd.f32 0.0, %v174
    %v176 = vpop.f32.mrb[0].mxu0
    %177 = vmatprep.mubr.f32.mxu0 0.0
    %178 = vmatmul.mubr.f32.gmra.mrb[0].mxu0 %v76
    %v179 = vpop.f32.mrb[0].mxu0
    %v180 = vadd.f32 0.0, %v179
    %v181 = vpop.f32.mrb[0].mxu0
    %182 = vdwg.mxu0
    %v183 = vadd.f32 %v25, %v145
    %v184 = vadd.f32 %v26, %v150
    %v185 = vadd.f32 %v27, %v155
    %v186 = vadd.f32 %v28, %v160
    %v187 = vadd.f32 %v29, %v165
    %v188 = vadd.f32 %v30, %v170
    %v189 = vadd.f32 %v31, %v175
    %v190 = vadd.f32 %v32, %v180
    %vm191 = vcmask 654336
    %192 = vst.msk [vmem:[#allocation2] sm:$0xff] %vm191, %v183
    %193 = vst.msk [vmem:[#allocation2 + $0x8] sm:$0xff] %vm191, %v184
    %194 = vst.msk [vmem:[#allocation2 + $0x10] sm:$0xff] %vm191, %v185
    %195 = vst.msk [vmem:[#allocation2 + $0x18] sm:$0xff] %vm191, %v186
    %196 = vst.msk [vmem:[#allocation2 + $0x20] sm:$0xff] %vm191, %v187
    %197 = vst.msk [vmem:[#allocation2 + $0x28] sm:$0xff] %vm191, %v188
    %198 = vst.msk [vmem:[#allocation2 + $0x30] sm:$0xff] %vm191, %v189
    %199 = vst.msk [vmem:[#allocation2 + $0x38] sm:$0xff] %vm191, %v190
    // Predicated region
    $region14: #{matmul_pallas.1} parent=1 // pred_check
      _
    $region15: #{matmul_pallas.1} parent=1 // pred_check_branch
      %201 = sbr.rel (0) target = $region17
    $region16: #{matmul_pallas.1} parent=1 // pred_region
      %s203 = ssub.s32 1024, 1024
      %204 = vsyncadd [#allocation3], %s203
      %s205 = sshll.u32 [#allocation2], 4
      %s206 = int_to_ptr.vmem [resolvable:$true] %s205
      %211 = dma.vmem_to_hbm [thread:$0]  %s206, 1024, %s2, [#allocation3], 128, 128, 8
    $region17: #{matmul_pallas.1} parent=1 // pred_fallthru
      _
    // Predicated region
    $region18: #{matmul_pallas.1} parent=1 // pred_check
      _
    $region19: #{matmul_pallas.1} parent=1 // pred_check_branch
      %213 = sbr.rel (0) target = $region21
    $region20: #{matmul_pallas.1} parent=1 // pred_region
      %214 = dma.done [#allocation3], 1024
    $region21: #{matmul_pallas.1} parent=1 // pred_fallthru
      _
    %215 = vsyncpa [#allocation3], 1

</llo_original>
